<compile_context>
chip_gen: v7x
topology: tpu7x:2x2x1
jax: 0.10.0
libtpu: 0.0.40
codegen_flags: <defaults>
</compile_context>

<pallas_src>
import functools

import jax
import jax.numpy as jnp
from jax.experimental import pallas as pl
from jax.experimental.pallas import tpu as pltpu


# --------------------------------------------------------------------------
# Fused kernel: MLP -> (sparsity + k=1 conv folded) output layer -> softmax
#               -> x_recon / logpxz (with the PyTorch batch-0 quirk)
# --------------------------------------------------------------------------
def decoder_mle_kernel(pwm_ref, z_ref, w1t_ref, b1_ref, w2t_ref, b2_ref,
                       wcomb_ref, bcomb_ref, x_ref,
                       out_ref, xr_ref, lp_ref, *, L, A):
    def mm(a, b):
        # single-pass bf16 MXU matmul, f32 accumulation
        return jnp.dot(a.astype(jnp.bfloat16), b.astype(jnp.bfloat16),
                       preferred_element_type=jnp.float32)

    # hidden1 = relu(z @ W1^T + b1);  hidden2 = sigmoid(hidden1 @ W2^T + b2)
    h1 = jnp.maximum(mm(z_ref[...], w1t_ref[...]) + b1_ref[...], 0.0)
    h2 = jax.nn.sigmoid(mm(h1, w2t_ref[...]) + b2_ref[...])

    # Output layer: sparsity-scaled final Linear and the k=1 Conv1d are folded
    # into one weight wrapper-side -> one MXU pass.
    #   out[b, a*L+s] = sum_c Wc[a, c] * (h2 @ w_eff + bf)[b, c*L+s] + bc[a]
    out_pl = mm(h2, wcomb_ref[...]) + bcomb_ref[...]           # (B, A*L), lanes = (a, s)
    out_ref[...] = out_pl                                       # conv output, pre-temperature

    # temperature: softplus(final_pwm_scale) scalar, read from SMEM
    u = out_pl * pwm_ref[0]

    # Alphabet planes are contiguous L-lane slabs of the (B, A*L) row, so the
    # per-(b, s) reductions over the alphabet are a few VPU max/add ops.
    m = u[:, 0:L]
    for a in range(1, A):
        m = jnp.maximum(m, u[:, a * L:(a + 1) * L])             # per-(b, s) max over alphabet
    m_full = jnp.concatenate([m] * A, axis=1)                   # broadcast back over planes

    xd_full = u - m_full                                        # (B, A*L)
    e_full = jnp.exp(xd_full)
    den = e_full[:, 0:L]
    for a in range(1, A):
        den = den + e_full[:, a * L:(a + 1) * L]                # per-(b, s) sum over alphabet

    # x_recon: one EUP reciprocal (instead of A divides) + ONE lane-dense store
    inv_den_full = jnp.concatenate([pl.reciprocal(den, approx=True)] * A, axis=1)
    xr_ref[...] = e_full * inv_den_full

    # PyTorch quirk: the log-softmax denominator comes from batch 0 only ([0])
    # and is broadcast over the batch; log() over L values, computed once.
    log_den0_full = jnp.concatenate([jnp.log(den[0:1, :])] * A, axis=1)   # (1, A*L)
    log_sm_full = xd_full - log_den0_full

    # logpxz: single cross-lane (XLU) reduction over the full (B, A*L) block.
    lp_ref[...] = jnp.sum(x_ref[...] * log_sm_full, axis=-1, keepdims=True)


# --------------------------------------------------------------------------
# Wrapper (jit this): parameter-only preprocessing + one pallas_call
# --------------------------------------------------------------------------
def decoder_mle_forward(x, z, params, *, B, L, C, A, n_patterns):
    """x: (B, L, A) one-hot, z: (B, z_dim) -> (x_recon, logpxz, out)."""
    f32 = jnp.float32
    H2 = params["w2"].shape[0]

    # ---- parameter-only preprocessing (fused under jit, no extra kernels) ----
    w1t = params["w1"].T                                        # (Zd, H1)
    b1 = params["b1"][None, :]
    w2t = params["w2"].T                                        # (H1, H2)
    b2 = params["b2"][None, :]

    # sparsity == 'logit': PyTorch scales the (H2, seq_len, channel)-viewed
    # weight^T by sigmoid(scale)[h, l]; in the flat C*L layout that is column j
    # scaled by sigmoid(scale)[:, j // C].
    scale_tiled = jnp.tile(params["scale"], (n_patterns, 1))    # (H2, L)
    w_eff = params["wf"].T * jnp.repeat(jax.nn.sigmoid(scale_tiled), C, axis=1)   # (H2, C*L)

    # Fold the Conv1d(kernel_size=1), which acts on the view(-1, C, L) of the
    # Linear output, into the Linear itself (exact; both are linear maps).
    wc2 = params["wc"][:, :, 0]                                 # (A, C)
    w_comb = jnp.einsum("hcl,ac->hal",
                        w_eff.reshape(H2, C, L), wc2).reshape(H2, A * L)
    b_comb = (jnp.einsum("cl,ac->al", params["bf"].reshape(C, L), wc2)
              + params["bc"][:, None]).reshape(1, A * L)

    # temperature: softplus (matches F.softplus; no overflow for large pwm)
    pwm_scale = jax.nn.softplus(params["pwm"]).astype(f32)      # (1,), lives in SMEM

    # x in the kernel's planar (a, s) lane layout: column a*L+s = x[b, s, a]
    x_planar = jnp.transpose(x, (0, 2, 1)).reshape(B, A * L)

    vmem = pl.BlockSpec(memory_space=pltpu.MemorySpace.VMEM)
    smem = pl.BlockSpec(memory_space=pltpu.MemorySpace.SMEM)

    # grid=() is optimal at these toy shapes; for production batch sizes add a
    # row-tiled "parallel" grid axis over B (weights kept resident with
    # constant index_maps; z / x_planar / outputs tiled by rows).
    out_pl, xr_pl, lp = pl.pallas_call(
        functools.partial(decoder_mle_kernel, L=L, A=A),
        out_shape=(
            jax.ShapeDtypeStruct((B, A * L), f32),              # conv output (planar, lane-dense)
            jax.ShapeDtypeStruct((B, A * L), f32),              # x_recon (planar, lane-dense)
            jax.ShapeDtypeStruct((B, 1), f32),                  # logpxz
        ),
        in_specs=[smem] + [vmem] * 8,
        out_specs=(vmem, vmem, vmem),
    )(pwm_scale, z, w1t, b1, w2t, b2, w_comb, b_comb, x_planar)

    out = out_pl.reshape(B, A, L)                               # (B, alph_size, seq_len)
    x_recon = jnp.transpose(xr_pl.reshape(B, A, L), (0, 2, 1))  # (B, seq_len, alph_size)
    logpxz = lp[:, 0]                                           # (B,)
    return x_recon, logpxz, out


# --------------------------------------------------------------------------
# Pure-JAX reference: faithful, HIGHEST-precision transcription of the PyTorch
# forward, including the view(-1, C, L) quirk, the 'logit' sparsity scaling
# applied under the (seq_len, channel) view, and the batch-0 log-denominator
# quirk.  The kernel uses bf16 matmuls, so comparison uses a 1e-2 tolerance
# (measured kernel error is ~1e-3).
# --------------------------------------------------------------------------
def reference_forward(x, z, p, *, B, L, C, A, n_patterns):
    hp = jax.lax.Precision.HIGHEST
    H2 = p["w2"].shape[0]
    h1 = jnp.maximum(jnp.dot(z, p["w1"].T, precision=hp) + p["b1"], 0.0)
    h2 = jax.nn.sigmoid(jnp.dot(h1, p["w2"].T, precision=hp) + p["b2"])
    scale_tiled = jnp.tile(p["scale"], (n_patterns, 1))
    w_sparse = (p["wf"].T.reshape(H2, L, C)
                * jax.nn.sigmoid(scale_tiled)[:, :, None]).reshape(H2, L * C)
    fl = jnp.dot(h2, w_sparse, precision=hp) + p["bf"]
    final = fl.reshape(B, C, L)                                 # view(-1, C, L) quirk
    out = jnp.einsum("ac,bcl->bal", p["wc"][:, :, 0], final,
                     precision=hp) + p["bc"][None, :, None]
    u = jnp.transpose(out, (0, 2, 1)) * jax.nn.softplus(p["pwm"][0])
    m = jnp.max(u, axis=2, keepdims=True)
    e = jnp.exp(u - m)
    x_recon = e / jnp.sum(e, axis=2, keepdims=True)
    xdev = u - m
    log_sm = xdev - jnp.log(jnp.sum(jnp.exp(xdev), axis=2, keepdims=True)[0])  # batch-0 quirk
    logpxz = jnp.sum(jnp.sum(x * log_sm, axis=-1), axis=-1)
    return x_recon, logpxz, out


if __name__ == "__main__":
    # DecoderMLE(hidden_architecture=[32, 16], z_dim=8, convolve_patterns=True,
    #            conv_size=10, alph_size=5, seq_len=8, nonlinearity='relu',
    #            final_nonlinearity='sigmoid', sparsity='logit',
    #            final_pwm_scale=True, dropout=False, n_patterns=2, output_bias=True)
    B = 2
    Z_DIM = 8
    H1, H2 = 32, 16
    CONV_SIZE = 10
    ALPH = 5
    SEQ = 8
    N_PATTERNS = 2

    key = jax.random.PRNGKey(0)
    ks = jax.random.split(key, 8)

    def xavier(k, shape, fan_in, fan_out):
        std = (2.0 / (fan_in + fan_out)) ** 0.5
        return std * jax.random.normal(k, shape, dtype=jnp.float32)

    params = {
        "w1": xavier(ks[0], (H1, Z_DIM), Z_DIM, H1),
        "b1": jnp.full((H1,), 0.1, jnp.float32),
        "w2": xavier(ks[1], (H2, H1), H1, H2),
        "b2": jnp.full((H2,), 0.1, jnp.float32),
        "wf": xavier(ks[2], (CONV_SIZE * SEQ, H2), H2, CONV_SIZE * SEQ),
        "bf": jnp.full((CONV_SIZE * SEQ,), 0.1, jnp.float32),
        "wc": xavier(ks[3], (ALPH, CONV_SIZE, 1), CONV_SIZE, ALPH),    # Conv1d weight
        "bc": jnp.full((ALPH,), 0.1, jnp.float32),                      # Conv1d bias
        "scale": xavier(ks[4], (H2 // N_PATTERNS, SEQ), SEQ, H2 // N_PATTERNS),
        "pwm": jnp.ones((1,), jnp.float32),                             # final_pwm_scale
    }

    z = jax.random.normal(ks[5], (B, Z_DIM), dtype=jnp.float32)
    cats = jax.random.randint(ks[6], (B, SEQ), 0, ALPH)
    x = jax.nn.one_hot(cats, ALPH, dtype=jnp.float32)                   # (B, seq_len, alph_size)

    fwd = jax.jit(functools.partial(decoder_mle_forward,
                                    B=B, L=SEQ, C=CONV_SIZE, A=ALPH,
                                    n_patterns=N_PATTERNS))
    x_recon, logpxz, out = fwd(x, z, params)
    jax.block_until_ready((x_recon, logpxz, out))

    xr_ref, lp_ref, out_ref = reference_forward(x, z, params, B=B, L=SEQ,
                                                C=CONV_SIZE, A=ALPH,
                                                n_patterns=N_PATTERNS)

    assert x_recon.shape == (B, SEQ, ALPH)
    assert logpxz.shape == (B,)
    assert out.shape == (B, ALPH, SEQ)
    # bf16-matmul kernel vs. f32 (HIGHEST) faithful reference: measured error
    # ~1e-3, tolerance 1e-2 (still far below any layout/plane-permutation bug).
    assert jnp.allclose(x_recon, xr_ref, rtol=1e-2, atol=1e-2)
    assert jnp.allclose(out, out_ref, rtol=1e-2, atol=1e-2)
    assert jnp.allclose(logpxz, lp_ref, rtol=1e-2, atol=1e-2)

    print("KERNEL_OK")
</pallas_src>

<mosaic_0001>
module attributes {stable_mosaic.version = 11 : i64} {
  func.func @decoder_mle_kernel(%arg0: memref<1xf32, #tpu.memory_space<smem>>, %arg1: memref<2x8xf32, #tpu.memory_space<vmem>>, %arg2: memref<8x32xf32, #tpu.memory_space<vmem>>, %arg3: memref<1x32xf32, #tpu.memory_space<vmem>>, %arg4: memref<32x16xf32, #tpu.memory_space<vmem>>, %arg5: memref<1x16xf32, #tpu.memory_space<vmem>>, %arg6: memref<16x40xf32, #tpu.memory_space<vmem>>, %arg7: memref<1x40xf32, #tpu.memory_space<vmem>>, %arg8: memref<2x40xf32, #tpu.memory_space<vmem>>, %arg9: memref<2x40xf32, #tpu.memory_space<vmem>>, %arg10: memref<2x40xf32, #tpu.memory_space<vmem>>, %arg11: memref<2x1xf32, #tpu.memory_space<vmem>>) attributes {dimension_semantics = [], scalar_prefetch = 0 : i64, scratch_operands = 0 : i64, tpu.core_type = #tpu.core_type<tc>} {
    %c0 = arith.constant 0 : index
    %c0_0 = arith.constant 0 : index
    %0 = vector.load %arg1[%c0, %c0_0] : memref<2x8xf32, #tpu.memory_space<vmem>>, vector<2x8xf32>
    %c0_1 = arith.constant 0 : index
    %c0_2 = arith.constant 0 : index
    %1 = vector.load %arg2[%c0_1, %c0_2] : memref<8x32xf32, #tpu.memory_space<vmem>>, vector<8x32xf32>
    %2 = arith.truncf %0 : vector<2x8xf32> to vector<2x8xbf16>
    %3 = arith.truncf %1 : vector<8x32xf32> to vector<8x32xbf16>
    %cst = arith.constant dense<0.000000e+00> : vector<2x32xf32>
    %4 = tpu.matmul %2, %3, %cst {dimension_numbers = #tpu.dot_dimension_numbers<[1], [0], [0], [1], [0, 0, 1, 1], [], []>} : vector<2x8xbf16>, vector<8x32xbf16>, vector<2x32xf32> -> vector<2x32xf32>
    %c0_3 = arith.constant 0 : index
    %c0_4 = arith.constant 0 : index
    %5 = vector.load %arg3[%c0_3, %c0_4] : memref<1x32xf32, #tpu.memory_space<vmem>>, vector<1x32xf32>
    %6 = vector.broadcast %5 : vector<1x32xf32> to vector<2x32xf32>
    %7 = arith.addf %4, %6 : vector<2x32xf32>
    %cst_5 = arith.constant 0.000000e+00 : f32
    %8 = vector.broadcast %cst_5 : f32 to vector<2x32xf32>
    %9 = arith.maximumf %7, %8 : vector<2x32xf32>
    %c0_6 = arith.constant 0 : index
    %c0_7 = arith.constant 0 : index
    %10 = vector.load %arg4[%c0_6, %c0_7] : memref<32x16xf32, #tpu.memory_space<vmem>>, vector<32x16xf32>
    %11 = arith.truncf %9 : vector<2x32xf32> to vector<2x32xbf16>
    %12 = arith.truncf %10 : vector<32x16xf32> to vector<32x16xbf16>
    %cst_8 = arith.constant dense<0.000000e+00> : vector<2x16xf32>
    %13 = tpu.matmul %11, %12, %cst_8 {dimension_numbers = #tpu.dot_dimension_numbers<[1], [0], [0], [1], [0, 0, 1, 1], [], []>} : vector<2x32xbf16>, vector<32x16xbf16>, vector<2x16xf32> -> vector<2x16xf32>
    %c0_9 = arith.constant 0 : index
    %c0_10 = arith.constant 0 : index
    %14 = vector.load %arg5[%c0_9, %c0_10] : memref<1x16xf32, #tpu.memory_space<vmem>>, vector<1x16xf32>
    %15 = vector.broadcast %14 : vector<1x16xf32> to vector<2x16xf32>
    %16 = arith.addf %13, %15 : vector<2x16xf32>
    %17 = arith.negf %16 : vector<2x16xf32>
    %18 = math.exp %17 : vector<2x16xf32>
    %cst_11 = arith.constant 1.000000e+00 : f32
    %19 = vector.broadcast %cst_11 : f32 to vector<2x16xf32>
    %20 = arith.addf %19, %18 : vector<2x16xf32>
    %21 = arith.divf %19, %20 : vector<2x16xf32>
    %c0_12 = arith.constant 0 : index
    %c0_13 = arith.constant 0 : index
    %22 = vector.load %arg6[%c0_12, %c0_13] : memref<16x40xf32, #tpu.memory_space<vmem>>, vector<16x40xf32>
    %23 = arith.truncf %21 : vector<2x16xf32> to vector<2x16xbf16>
    %24 = arith.truncf %22 : vector<16x40xf32> to vector<16x40xbf16>
    %cst_14 = arith.constant dense<0.000000e+00> : vector<2x40xf32>
    %25 = tpu.matmul %23, %24, %cst_14 {dimension_numbers = #tpu.dot_dimension_numbers<[1], [0], [0], [1], [0, 0, 1, 1], [], []>} : vector<2x16xbf16>, vector<16x40xbf16>, vector<2x40xf32> -> vector<2x40xf32>
    %c0_15 = arith.constant 0 : index
    %c0_16 = arith.constant 0 : index
    %26 = vector.load %arg7[%c0_15, %c0_16] : memref<1x40xf32, #tpu.memory_space<vmem>>, vector<1x40xf32>
    %27 = vector.broadcast %26 : vector<1x40xf32> to vector<2x40xf32>
    %28 = arith.addf %25, %27 : vector<2x40xf32>
    %c0_17 = arith.constant 0 : index
    %c0_18 = arith.constant 0 : index
    %29 = vector.load %arg9[%c0_17, %c0_18] : memref<2x40xf32, #tpu.memory_space<vmem>>, vector<2x40xf32>
    tpu.vector_store %arg9[%c0_17, %c0_18], %28 {strides = array<i32>} : memref<2x40xf32, #tpu.memory_space<vmem>>, vector<2x40xf32>,
    %c0_19 = arith.constant 0 : index
    %30 = memref.load %arg0[%c0_19] : memref<1xf32, #tpu.memory_space<smem>>
    %31 = vector.broadcast %30 : f32 to vector<2x40xf32>
    %32 = arith.mulf %28, %31 : vector<2x40xf32>
    %33 = vector.extract_strided_slice %32 {offsets = [0, 0], sizes = [2, 8], strides = [1, 1]} : vector<2x40xf32> to vector<2x8xf32>
    %34 = vector.extract_strided_slice %32 {offsets = [0, 8], sizes = [2, 8], strides = [1, 1]} : vector<2x40xf32> to vector<2x8xf32>
    %35 = arith.maximumf %33, %34 : vector<2x8xf32>
    %36 = vector.extract_strided_slice %32 {offsets = [0, 16], sizes = [2, 8], strides = [1, 1]} : vector<2x40xf32> to vector<2x8xf32>
    %37 = arith.maximumf %35, %36 : vector<2x8xf32>
    %38 = vector.extract_strided_slice %32 {offsets = [0, 24], sizes = [2, 8], strides = [1, 1]} : vector<2x40xf32> to vector<2x8xf32>
    %39 = arith.maximumf %37, %38 : vector<2x8xf32>
    %40 = vector.extract_strided_slice %32 {offsets = [0, 32], sizes = [2, 8], strides = [1, 1]} : vector<2x40xf32> to vector<2x8xf32>
    %41 = arith.maximumf %39, %40 : vector<2x8xf32>
    %42 = tpu.concatenate %41, %41, %41, %41, %41 in 1 : vector<2x8xf32>, vector<2x8xf32>, vector<2x8xf32>, vector<2x8xf32>, vector<2x8xf32> -> vector<2x40xf32>
    %43 = arith.subf %32, %42 : vector<2x40xf32>
    %44 = math.exp %43 : vector<2x40xf32>
    %45 = vector.extract_strided_slice %44 {offsets = [0, 0], sizes = [2, 8], strides = [1, 1]} : vector<2x40xf32> to vector<2x8xf32>
    %46 = vector.extract_strided_slice %44 {offsets = [0, 8], sizes = [2, 8], strides = [1, 1]} : vector<2x40xf32> to vector<2x8xf32>
    %47 = arith.addf %45, %46 : vector<2x8xf32>
    %48 = vector.extract_strided_slice %44 {offsets = [0, 16], sizes = [2, 8], strides = [1, 1]} : vector<2x40xf32> to vector<2x8xf32>
    %49 = arith.addf %47, %48 : vector<2x8xf32>
    %50 = vector.extract_strided_slice %44 {offsets = [0, 24], sizes = [2, 8], strides = [1, 1]} : vector<2x40xf32> to vector<2x8xf32>
    %51 = arith.addf %49, %50 : vector<2x8xf32>
    %52 = vector.extract_strided_slice %44 {offsets = [0, 32], sizes = [2, 8], strides = [1, 1]} : vector<2x40xf32> to vector<2x8xf32>
    %53 = arith.addf %51, %52 : vector<2x8xf32>
    %54 = tpu.reciprocal %53 {approx = true} : vector<2x8xf32> -> vector<2x8xf32>
    %55 = tpu.concatenate %54, %54, %54, %54, %54 in 1 : vector<2x8xf32>, vector<2x8xf32>, vector<2x8xf32>, vector<2x8xf32>, vector<2x8xf32> -> vector<2x40xf32>
    %56 = arith.mulf %44, %55 : vector<2x40xf32>
    %c0_20 = arith.constant 0 : index
    %c0_21 = arith.constant 0 : index
    %57 = vector.load %arg10[%c0_20, %c0_21] : memref<2x40xf32, #tpu.memory_space<vmem>>, vector<2x40xf32>
    tpu.vector_store %arg10[%c0_20, %c0_21], %56 {strides = array<i32>} : memref<2x40xf32, #tpu.memory_space<vmem>>, vector<2x40xf32>,
    %58 = vector.extract_strided_slice %53 {offsets = [0, 0], sizes = [1, 8], strides = [1, 1]} : vector<2x8xf32> to vector<1x8xf32>
    %59 = math.log %58 : vector<1x8xf32>
    %60 = tpu.concatenate %59, %59, %59, %59, %59 in 1 : vector<1x8xf32>, vector<1x8xf32>, vector<1x8xf32>, vector<1x8xf32>, vector<1x8xf32> -> vector<1x40xf32>
    %61 = vector.broadcast %60 : vector<1x40xf32> to vector<2x40xf32>
    %62 = arith.subf %43, %61 : vector<2x40xf32>
    %c0_22 = arith.constant 0 : index
    %c0_23 = arith.constant 0 : index
    %63 = vector.load %arg8[%c0_22, %c0_23] : memref<2x40xf32, #tpu.memory_space<vmem>>, vector<2x40xf32>
    %64 = arith.mulf %63, %62 : vector<2x40xf32>
    %cst_24 = arith.constant dense<0.000000e+00> : vector<2xf32>
    %65 = vector.multi_reduction <add>, %64, %cst_24 [1] : vector<2x40xf32> to vector<2xf32>
    %66 = vector.shape_cast %65 : vector<2xf32> to vector<2x1xf32>
    %c0_25 = arith.constant 0 : index
    %c0_26 = arith.constant 0 : index
    %67 = vector.load %arg11[%c0_25, %c0_26] : memref<2x1xf32, #tpu.memory_space<vmem>>, vector<2x1xf32>
    tpu.vector_store %arg11[%c0_25, %c0_26], %66 {strides = array<i32>} : memref<2x1xf32, #tpu.memory_space<vmem>>, vector<2x1xf32>,
    return
  }
}

</mosaic_0001>

<llo_original>
// kernel: decoder_mle_forward.1
$region0: #{decoder_mle_forward.1}
  #allocation0 [shape = 'u32[]', space=smem, size = 0x4, offset = 0x4, fixed_abs, tag = 'smem constant byte address 0x4 - core index']
  #allocation1 [shape = 'u32[144,128]{1,0:T(1,128)}', space=vmem, size = 0x12000, scoped, tag = 'internal scratch']
  #allocation2 [shape = 'f32[1]{0:T(128)S(6)}', space=smem, size = 0x200, scoped, tag = 'scoped memory for decoder_mle_forward.1']
  %s0 = inlined_call_operand.<no memory space> [shape: f32[1], index: 0, kind: input, shape index: {}]
  %s1 = inlined_call_operand.vmem [shape: f32[2,8], index: 1, kind: input, shape index: {}]
  %s2 = inlined_call_operand.vmem [shape: f32[8,32], index: 2, kind: input, shape index: {}]
  %s3 = inlined_call_operand.vmem [shape: f32[1,32], index: 3, kind: input, shape index: {}]
  %s4 = inlined_call_operand.vmem [shape: f32[32,16], index: 4, kind: input, shape index: {}]
  %s5 = inlined_call_operand.vmem [shape: f32[1,16], index: 5, kind: input, shape index: {}]
  %s6 = inlined_call_operand.vmem [shape: f32[16,40], index: 6, kind: input, shape index: {}]
  %s7 = inlined_call_operand.vmem [shape: f32[1,40], index: 7, kind: input, shape index: {}]
  %s8 = inlined_call_operand.vmem [shape: f32[2,40], index: 8, kind: input, shape index: {}]
  %s9 = inlined_call_operand.vmem [shape: f32[2,40], index: 9, kind: output, shape index: {0}]
  %s10 = inlined_call_operand.vmem [shape: f32[2,40], index: 10, kind: output, shape index: {1}]
  %s11 = inlined_call_operand.vmem [shape: f32[2,1], index: 11, kind: output, shape index: {2}]
  %12 = xla_tuple %s9, %s10, %s11
  %s13 = sld [smem:[#allocation0]]
  $region62: #{decoder_mle_forward.1} parent=0
    _
  %s15 = ssub.s32 1, %s13
  %s16 = scalar_select 0, %s15, %s13
  %17 = sst [smem:[#allocation2]] %s0
  // Predicated region
  $region2: #{decoder_mle_forward.1} parent=0 // pred_check
    _
  $region3: #{decoder_mle_forward.1} parent=0 // pred_check_branch
    %19 = sbr.rel (0) target = $region5
  $region4: #{decoder_mle_forward.1} parent=0 // pred_region
    _
  $region5: #{decoder_mle_forward.1} parent=0 // pred_fallthru
    _
  // Predicated region
  $region6: #{decoder_mle_forward.1} parent=0 // pred_check
    _
  $region7: #{decoder_mle_forward.1} parent=0 // pred_check_branch
    %21 = sbr.rel (0) target = $region9
  $region8: #{decoder_mle_forward.1} parent=0 // pred_region
    _
  $region9: #{decoder_mle_forward.1} parent=0 // pred_fallthru
    _
  // Predicated region
  $region10: #{decoder_mle_forward.1} parent=0 // pred_check
    _
  $region11: #{decoder_mle_forward.1} parent=0 // pred_check_branch
    %23 = sbr.rel (0) target = $region13
  $region12: #{decoder_mle_forward.1} parent=0 // pred_region
    _
  $region13: #{decoder_mle_forward.1} parent=0 // pred_fallthru
    _
  // Predicated region
  $region14: #{decoder_mle_forward.1} parent=0 // pred_check
    _
  $region15: #{decoder_mle_forward.1} parent=0 // pred_check_branch
    %25 = sbr.rel (0) target = $region17
  $region16: #{decoder_mle_forward.1} parent=0 // pred_region
    _
  $region17: #{decoder_mle_forward.1} parent=0 // pred_fallthru
    _
  // Predicated region
  $region18: #{decoder_mle_forward.1} parent=0 // pred_check
    _
  $region19: #{decoder_mle_forward.1} parent=0 // pred_check_branch
    %27 = sbr.rel (0) target = $region21
  $region20: #{decoder_mle_forward.1} parent=0 // pred_region
    _
  $region21: #{decoder_mle_forward.1} parent=0 // pred_fallthru
    _
  // Predicated region
  $region22: #{decoder_mle_forward.1} parent=0 // pred_check
    _
  $region23: #{decoder_mle_forward.1} parent=0 // pred_check_branch
    %29 = sbr.rel (0) target = $region25
  $region24: #{decoder_mle_forward.1} parent=0 // pred_region
    _
  $region25: #{decoder_mle_forward.1} parent=0 // pred_fallthru
    _
  // Predicated region
  $region26: #{decoder_mle_forward.1} parent=0 // pred_check
    _
  $region27: #{decoder_mle_forward.1} parent=0 // pred_check_branch
    %31 = sbr.rel (0) target = $region29
  $region28: #{decoder_mle_forward.1} parent=0 // pred_region
    _
  $region29: #{decoder_mle_forward.1} parent=0 // pred_fallthru
    _
  // Predicated region
  $region30: #{decoder_mle_forward.1} parent=0 // pred_check
    _
  $region31: #{decoder_mle_forward.1} parent=0 // pred_check_branch
    %33 = sbr.rel (0) target = $region33
  $region32: #{decoder_mle_forward.1} parent=0 // pred_region
    _
  $region33: #{decoder_mle_forward.1} parent=0 // pred_fallthru
    _
  // Predicated region
  $region34: #{decoder_mle_forward.1} parent=0 // pred_check
    _
  $region35: #{decoder_mle_forward.1} parent=0 // pred_check_branch
    %35 = sbr.rel (0) target = $region37
  $region36: #{decoder_mle_forward.1} parent=0 // pred_region
    _
  $region37: #{decoder_mle_forward.1} parent=0 // pred_fallthru
    _
  %v37 = vld [vmem:[%s1] sm:$0x3]
  %v38 = vld [vmem:[%s2] sm:$0xff]
  %v39 = vpack.c.bf16 %v37, %v37
  %v40 = vpack.c.bf16 %v38, %v38
  %v41 = vld [vmem:[%s3] sm:$0x1]
  %v43 = vlaneseq
  %v44 = vshrl.u32 %v43, 7
  %v45 = vsub.s32 0, %v44
  %v46 = vrot.slane %v41, %v45
  %vm48 = vcmask 64512
  %v50 = vsel %vm48, %v39, 0
  %vm52 = vcmask 1043456
  %v54 = vsel %vm52, %v40, 0
  %56 = vmatprep.subr.bf16.mxu0 0
  %57 = vmatpush1.bf16.msra.mxu0 %v54
  %58 = vmatprep.subr.bf16.mxu0 0
  %59 = vmatpush1.bf16.msra.mxu0 0
  %60 = vmatprep.subr.bf16.mxu0 0
  %61 = vmatpush1.bf16.msra.mxu0 0
  %62 = vmatprep.subr.bf16.mxu0 0
  %63 = vmatpush1.bf16.msra.mxu0 0
  %64 = vmatprep.subr.bf16.mxu0 0
  %65 = vmatpush1.bf16.msra.mxu0 0
  %66 = vmatprep.subr.bf16.mxu0 0
  %67 = vmatpush1.bf16.msra.mxu0 0
  %68 = vmatprep.subr.bf16.mxu0 0
  %69 = vmatpush1.bf16.msra.mxu0 0
  %70 = vmatprep.subr.bf16.mxu0 0
  %71 = vmatpush1.bf16.msra.mxu0 0
  %72 = vmatprep.subr.bf16.mxu0 0
  %73 = vmatpush1.bf16.msra.mxu0 0
  %74 = vmatprep.subr.bf16.mxu0 0
  %75 = vmatpush1.bf16.msra.mxu0 0
  %76 = vmatprep.subr.bf16.mxu0 0
  %77 = vmatpush1.bf16.msra.mxu0 0
  %78 = vmatprep.subr.bf16.mxu0 0
  %79 = vmatpush1.bf16.msra.mxu0 0
  %80 = vmatprep.subr.bf16.mxu0 0
  %81 = vmatpush1.bf16.msra.mxu0 0
  %82 = vmatprep.subr.bf16.mxu0 0
  %83 = vmatpush1.bf16.msra.mxu0 0
  %84 = vmatprep.subr.bf16.mxu0 0
  %85 = vmatpush1.bf16.msra.mxu0 0
  %86 = vmatprep.subr.bf16.mxu0 0
  %87 = vmatpush1.bf16.msra.mxu0 0
  %88 = vmatprep.mubr.bf16.mxu0 0
  %89 = vmatmul.mubr.bf16.gmra.mrb[0].mxu0 %v50
  %v90 = vpop.f32.mrb[0].mxu0
  %v91 = vadd.f32 %v46, %v90
  %v92 = vpop.f32.mrb[0].mxu0
  %v93 = vpop.f32.mrb[0].mxu0
  %v94 = vpop.f32.mrb[0].mxu0
  %95 = vdwg.mxu0
  %v96 = vmax.f32 %v91, 0.0
  %v97 = vld [vmem:[%s4] sm:$0xff]
  %v98 = vld [vmem:[%s4 + $0x8] sm:$0xff]
  %v99 = vld [vmem:[%s4 + $0x10] sm:$0xff]
  %v100 = vld [vmem:[%s4 + $0x18] sm:$0xff]
  %v101 = vpack.c.bf16 %v96, %v96
  %v102 = vpack.c.bf16 %v98, %v97
  %v103 = vpack.c.bf16 %v100, %v99
  %v104 = vld [vmem:[%s5] sm:$0x1]
  %v106 = vlaneseq
  %v107 = vshrl.u32 %v106, 7
  %v108 = vsub.s32 0, %v107
  %v109 = vrot.slane %v104, %v108
  %vm111 = vcmask 261120
  %v113 = vsel %vm111, %v101, 0
  %115 = vmatprep.subr.bf16.mxu0 0
  %116 = vmatpush1.bf16.msra.mxu0 %v102
  %117 = vmatprep.subr.bf16.mxu0 0
  %118 = vmatpush1.bf16.msra.mxu0 %v103
  %119 = vmatprep.subr.bf16.mxu0 0
  %120 = vmatpush1.bf16.msra.mxu0 0
  %121 = vmatprep.subr.bf16.mxu0 0
  %122 = vmatpush1.bf16.msra.mxu0 0
  %123 = vmatprep.subr.bf16.mxu0 0
  %124 = vmatpush1.bf16.msra.mxu0 0
  %125 = vmatprep.subr.bf16.mxu0 0
  %126 = vmatpush1.bf16.msra.mxu0 0
  %127 = vmatprep.subr.bf16.mxu0 0
  %128 = vmatpush1.bf16.msra.mxu0 0
  %129 = vmatprep.subr.bf16.mxu0 0
  %130 = vmatpush1.bf16.msra.mxu0 0
  %131 = vmatprep.subr.bf16.mxu0 0
  %132 = vmatpush1.bf16.msra.mxu0 0
  %133 = vmatprep.subr.bf16.mxu0 0
  %134 = vmatpush1.bf16.msra.mxu0 0
  %135 = vmatprep.subr.bf16.mxu0 0
  %136 = vmatpush1.bf16.msra.mxu0 0
  %137 = vmatprep.subr.bf16.mxu0 0
  %138 = vmatpush1.bf16.msra.mxu0 0
  %139 = vmatprep.subr.bf16.mxu0 0
  %140 = vmatpush1.bf16.msra.mxu0 0
  %141 = vmatprep.subr.bf16.mxu0 0
  %142 = vmatpush1.bf16.msra.mxu0 0
  %143 = vmatprep.subr.bf16.mxu0 0
  %144 = vmatpush1.bf16.msra.mxu0 0
  %145 = vmatprep.subr.bf16.mxu0 0
  %146 = vmatpush1.bf16.msra.mxu0 0
  %147 = vmatprep.mubr.bf16.mxu0 0
  %148 = vmatmul.mubr.bf16.gmra.mrb[0].mxu0 %v113
  %v149 = vpop.f32.mrb[0].mxu0
  %v150 = vadd.f32 %v109, %v149
  %v151 = vpop.f32.mrb[0].mxu0
  %v152 = vpop.f32.mrb[0].mxu0
  %v153 = vpop.f32.mrb[0].mxu0
  %154 = vdwg.mxu0
  %v155 = vxor.u32 %v150, 2147483648
  %v156 = vmul.f32 %v155, 1.442695
  %v157 = vpow.pop %v156
  %v158 = vadd.f32 %v157, 1.0
  %v159 = vrcp.pop %v158
  %v160 = vmul.f32 1.0, %v159
  %v161 = vld [vmem:[%s6] sm:$0xff]
  %v162 = vld [vmem:[%s6 + $0x8] sm:$0xff]
  %v163 = vpack.c.bf16 %v160, %v160
  %v164 = vpack.c.bf16 %v162, %v161
  %v165 = vld [vmem:[%s7] sm:$0x1]
  %v167 = vlaneseq
  %v168 = vshrl.u32 %v167, 7
  %v169 = vsub.s32 0, %v168
  %v170 = vrot.slane %v165, %v169
  %vm172 = vcmask 130048
  %v174 = vsel %vm172, %v163, 0
  %176 = vmatprep.subr.bf16.mxu0 0
  %177 = vmatpush1.bf16.msra.mxu0 %v164
  %178 = vmatprep.subr.bf16.mxu0 0
  %179 = vmatpush1.bf16.msra.mxu0 0
  %180 = vmatprep.subr.bf16.mxu0 0
  %181 = vmatpush1.bf16.msra.mxu0 0
  %182 = vmatprep.subr.bf16.mxu0 0
  %183 = vmatpush1.bf16.msra.mxu0 0
  %184 = vmatprep.subr.bf16.mxu0 0
  %185 = vmatpush1.bf16.msra.mxu0 0
  %186 = vmatprep.subr.bf16.mxu0 0
  %187 = vmatpush1.bf16.msra.mxu0 0
  %188 = vmatprep.subr.bf16.mxu0 0
  %189 = vmatpush1.bf16.msra.mxu0 0
  %190 = vmatprep.subr.bf16.mxu0 0
  %191 = vmatpush1.bf16.msra.mxu0 0
  %192 = vmatprep.subr.bf16.mxu0 0
  %193 = vmatpush1.bf16.msra.mxu0 0
  %194 = vmatprep.subr.bf16.mxu0 0
  %195 = vmatpush1.bf16.msra.mxu0 0
  %196 = vmatprep.subr.bf16.mxu0 0
  %197 = vmatpush1.bf16.msra.mxu0 0
  %198 = vmatprep.subr.bf16.mxu0 0
  %199 = vmatpush1.bf16.msra.mxu0 0
  %200 = vmatprep.subr.bf16.mxu0 0
  %201 = vmatpush1.bf16.msra.mxu0 0
  %202 = vmatprep.subr.bf16.mxu0 0
  %203 = vmatpush1.bf16.msra.mxu0 0
  %204 = vmatprep.subr.bf16.mxu0 0
  %205 = vmatpush1.bf16.msra.mxu0 0
  %206 = vmatprep.subr.bf16.mxu0 0
  %207 = vmatpush1.bf16.msra.mxu0 0
  %208 = vmatprep.mubr.bf16.mxu0 0
  %209 = vmatmul.mubr.bf16.gmra.mrb[0].mxu0 %v174
  %v210 = vpop.f32.mrb[0].mxu0
  %v211 = vadd.f32 %v170, %v210
  %v212 = vpop.f32.mrb[0].mxu0
  %v213 = vpop.f32.mrb[0].mxu0
  %v214 = vpop.f32.mrb[0].mxu0
  %215 = vdwg.mxu0
  %vm216 = vcmask 320512
  %217 = vst.msk [vmem:[%s9] sm:$0x3] %vm216, %v211
  %s218 = sld [smem:[#allocation2]]
  %v219 = vstv %s218
  %v220 = vmul.f32 %v211, %v219
  %222 = vrot.lane.b32.xlu0 %v220, 120
  %v223 = vpop.permute.xlu0 %222
  %v225 = vmax.f32 %v220, %v223
  %226 = vrot.lane.b32.xlu0 %v220, 112
  %v227 = vpop.permute.xlu0 %226
  %v229 = vmax.f32 %v225, %v227
  %230 = vrot.lane.b32.xlu0 %v220, 104
  %v231 = vpop.permute.xlu0 %230
  %v233 = vmax.f32 %v229, %v231
  %234 = vrot.lane.b32.xlu0 %v220, 96
  %v235 = vpop.permute.xlu0 %234
  %v237 = vmax.f32 %v233, %v235
  %239 = vrot.lane.b32.xlu0 %v237, 8
  %v240 = vpop.permute.xlu0 %239
  %242 = vrot.lane.b32.xlu0 %v237, 16
  %v243 = vpop.permute.xlu0 %242
  %245 = vrot.lane.b32.xlu0 %v237, 24
  %v246 = vpop.permute.xlu0 %245
  %248 = vrot.lane.b32.xlu0 %v237, 32
  %v249 = vpop.permute.xlu0 %248
  %v251 = vsel %vm48, %v237, %v240
  %v252 = vsel %vm172, %v251, %v243
  %vm253 = vcmask 195584
  %v254 = vsel %vm253, %v252, %v246
  %v255 = vsel %vm111, %v254, %v249
  %v256 = vsub.f32 %v220, %v255
  %v257 = vmul.f32 %v256, 1.442695
  %v258 = vpow.pop %v257
  %260 = vrot.lane.b32.xlu0 %v258, 120
  %v261 = vpop.permute.xlu0 %260
  %v263 = vadd.f32 %v258, %v261
  %264 = vrot.lane.b32.xlu0 %v258, 112
  %v265 = vpop.permute.xlu0 %264
  %v267 = vadd.f32 %v263, %v265
  %268 = vrot.lane.b32.xlu0 %v258, 104
  %v269 = vpop.permute.xlu0 %268
  %v271 = vadd.f32 %v267, %v269
  %272 = vrot.lane.b32.xlu0 %v258, 96
  %v273 = vpop.permute.xlu0 %272
  %v275 = vadd.f32 %v271, %v273
  %v276 = vrcp.pop %v275
  %278 = vrot.lane.b32.xlu0 %v276, 8
  %v279 = vpop.permute.xlu0 %278
  %281 = vrot.lane.b32.xlu0 %v276, 16
  %v282 = vpop.permute.xlu0 %281
  %284 = vrot.lane.b32.xlu0 %v276, 24
  %v285 = vpop.permute.xlu0 %284
  %287 = vrot.lane.b32.xlu0 %v276, 32
  %v288 = vpop.permute.xlu0 %287
  %v290 = vsel %vm48, %v276, %v279
  %v291 = vsel %vm172, %v290, %v282
  %v292 = vsel %vm253, %v291, %v285
  %v293 = vsel %vm111, %v292, %v288
  %v294 = vmul.f32 %v258, %v293
  %295 = vst.msk [vmem:[%s10] sm:$0x3] %vm216, %v294
  %v296 = vlog2.pop %v275
  %v297 = vmul.f32 %v296, 0.6931472
  %299 = vrot.lane.b32.xlu0 %v297, 8
  %v300 = vpop.permute.xlu0 %299
  %302 = vrot.lane.b32.xlu0 %v297, 16
  %v303 = vpop.permute.xlu0 %302
  %305 = vrot.lane.b32.xlu0 %v297, 24
  %v306 = vpop.permute.xlu0 %305
  %308 = vrot.lane.b32.xlu0 %v297, 32
  %v309 = vpop.permute.xlu0 %308
  %v311 = vsel %vm48, %v297, %v300
  %v312 = vsel %vm172, %v311, %v303
  %v313 = vsel %vm253, %v312, %v306
  %v314 = vsel %vm111, %v313, %v309
  %v315 = vlaneseq
  %v316 = vshrl.u32 %v315, 7
  %v317 = vsub.s32 0, %v316
  %v318 = vrot.slane %v314, %v317
  %v319 = vsub.f32 %v256, %v318
  %v320 = vld [vmem:[%s8] sm:$0x3]
  %v321 = vmul.f32 %v320, %v319
  %v322 = vsel %vm216, %v321, 0.0
  %323 = vadd.xlane.f32.xlu0 %v322
  %v324 = vpop.xlane.xlu0 %323
  %vm325 = vcmask 1024
  %326 = vst.msk [vmem:[%s11] sm:$0x3] %vm325, %v324
  // Predicated region
  $region38: #{decoder_mle_forward.1} parent=0 // pred_check
    _
  $region39: #{decoder_mle_forward.1} parent=0 // pred_check_branch
    %328 = sbr.rel (0) target = $region41
  $region40: #{decoder_mle_forward.1} parent=0 // pred_region
    _
  $region41: #{decoder_mle_forward.1} parent=0 // pred_fallthru
    _
  // Predicated region
  $region42: #{decoder_mle_forward.1} parent=0 // pred_check
    _
  $region43: #{decoder_mle_forward.1} parent=0 // pred_check_branch
    %330 = sbr.rel (0) target = $region45
  $region44: #{decoder_mle_forward.1} parent=0 // pred_region
    _
  $region45: #{decoder_mle_forward.1} parent=0 // pred_fallthru
    _
  // Predicated region
  $region46: #{decoder_mle_forward.1} parent=0 // pred_check
    _
  $region47: #{decoder_mle_forward.1} parent=0 // pred_check_branch
    %332 = sbr.rel (0) target = $region49
  $region48: #{decoder_mle_forward.1} parent=0 // pred_region
    _
  $region49: #{decoder_mle_forward.1} parent=0 // pred_fallthru
    _
  // Predicated region
  $region50: #{decoder_mle_forward.1} parent=0 // pred_check
    _
  $region51: #{decoder_mle_forward.1} parent=0 // pred_check_branch
    %334 = sbr.rel (0) target = $region53
  $region52: #{decoder_mle_forward.1} parent=0 // pred_region
    _
  $region53: #{decoder_mle_forward.1} parent=0 // pred_fallthru
    _
  // Predicated region
  $region54: #{decoder_mle_forward.1} parent=0 // pred_check
    _
  $region55: #{decoder_mle_forward.1} parent=0 // pred_check_branch
    %336 = sbr.rel (0) target = $region57
  $region56: #{decoder_mle_forward.1} parent=0 // pred_region
    _
  $region57: #{decoder_mle_forward.1} parent=0 // pred_fallthru
    _
  // Predicated region
  $region58: #{decoder_mle_forward.1} parent=0 // pred_check
    _
  $region59: #{decoder_mle_forward.1} parent=0 // pred_check_branch
    %338 = sbr.rel (0) target = $region61
  $region60: #{decoder_mle_forward.1} parent=0 // pred_region
    _
  $region61: #{decoder_mle_forward.1} parent=0 // pred_fallthru
    _

</llo_original>
